<compile_context>
chip_gen: v7x
topology: tpu7x:2x2x1
jax: 0.10.0
libtpu: 0.0.40
codegen_flags: <defaults>
</compile_context>

<pallas_src>
import jax
import jax.numpy as jnp
from jax.experimental import pallas as pl
from jax.experimental.pallas import tpu as pltpu


def _round_up(x, m):
    return ((x + m - 1) // m) * m


def gmf_kernel(u_ref, v_ref, w_ref, b_ref, o_ref):
    # u_ref, v_ref: (TB, D) f32 VMEM   gathered user / item embedding rows
    # w_ref       : (1, D)  f32 VMEM   Linear(D, 1) weight in PyTorch (out, in) layout
    # b_ref       : (1, 1)  f32 SMEM   Linear bias
    # o_ref       : (1, TB) f32 VMEM   lane-dense output row for this batch tile
    mf = u_ref[...] * v_ref[...] * w_ref[...]          # VPU: u * v * w   (TB, D)
    logits = jnp.sum(mf, axis=-1)                      # XLU lane-reduce  (TB,)
    row = jax.nn.sigmoid(logits + b_ref[0, 0])         # bias + sigmoid (EUP) on dense vector
    o_ref[0, :] = row.astype(o_ref.dtype)              # full-width lane-dense store


def gmf_forward(user_emb, item_emb, w, b, *, tile_b):
    """user_emb/item_emb: (B, D) f32 with B % tile_b == 0; w: (1, D); b: (1, 1).

    Returns sigmoid((user_emb * item_emb) @ w.T + b) as (B, 1) f32.
    """
    B, D = user_emb.shape
    assert B % tile_b == 0, "batch must already be padded to a multiple of tile_b"
    n_tiles = B // tile_b
    out_row = pl.pallas_call(
        gmf_kernel,
        out_shape=jax.ShapeDtypeStruct((1, B), jnp.float32),
        grid_spec=pltpu.PrefetchScalarGridSpec(
            num_scalar_prefetch=0,
            grid=(n_tiles,),
            in_specs=[
                pl.BlockSpec((tile_b, D), lambda i: (i, 0)),          # user tile
                pl.BlockSpec((tile_b, D), lambda i: (i, 0)),          # item tile
                pl.BlockSpec((1, D), lambda i: (0, 0)),               # weight row (shared)
                pl.BlockSpec(memory_space=pltpu.MemorySpace.SMEM),    # bias scalar
            ],
            out_specs=pl.BlockSpec((1, tile_b), lambda i: (0, i)),    # lane-dense row
        ),
        compiler_params=pltpu.CompilerParams(
            dimension_semantics=("parallel",)),
    )(user_emb, item_emb, w, b)
    return out_row.reshape(B, 1)


def gmf_apply(params, user_vector, item_vector, *, tile_b=1024):
    B = user_vector.shape[0]
    # Big lane-aligned tiles amortize per-step overhead; clamp so tiny batches
    # don't over-pad.  tile_b stays a multiple of 128 so output stores are dense.
    tile_b = min(tile_b, _round_up(B, 128))
    b_padded = _round_up(B, tile_b)
    if b_padded != B:
        pad = b_padded - B
        user_vector = jnp.concatenate(
            [user_vector, jnp.zeros((pad,), user_vector.dtype)])
        item_vector = jnp.concatenate(
            [item_vector, jnp.zeros((pad,), item_vector.dtype)])
    # TODO(synk): fuse the embedding gather into the kernel (scalar-prefetch ids +
    # row DMAs) to remove this extra (B, D) HBM round trip; with small D the
    # per-row DMAs are too tiny to beat XLA's gather, so it stays in the wrapper.
    user_emb = jnp.take(params["user_table"], user_vector, axis=0)   # (Bp, D)
    item_emb = jnp.take(params["item_table"], item_vector, axis=0)   # (Bp, D)
    out = gmf_forward(user_emb, item_emb, params["w"], params["b"], tile_b=tile_b)
    return out[:B]                                                    # (B, 1)


def init_params(key, n_users, n_items, latent_dim):
    k1, k2, k3, k4 = jax.random.split(key, 4)
    # nn.Embedding default init: N(0, 1)
    user_table = jax.random.normal(k1, (n_users, latent_dim), jnp.float32)
    item_table = jax.random.normal(k2, (n_items, latent_dim), jnp.float32)
    # nn.Linear(latent_dim, 1) default init: U(-1/sqrt(D), 1/sqrt(D));
    # weight kept in PyTorch (out_features, in_features) = (1, D) layout.
    bound = 1.0 / jnp.sqrt(latent_dim)
    w = jax.random.uniform(k3, (1, latent_dim), jnp.float32, -bound, bound)
    b = jax.random.uniform(k4, (1, 1), jnp.float32, -bound, bound)
    return {"user_table": user_table, "item_table": item_table, "w": w, "b": b}


if __name__ == "__main__":
    n_users, n_items, latent_dim = 10, 12, 32
    batch = 8

    key = jax.random.PRNGKey(0)
    kp, ku, ki = jax.random.split(key, 3)
    params = init_params(kp, n_users, n_items, latent_dim)

    user_vector = jax.random.randint(ku, (batch,), 0, n_users, dtype=jnp.int32)
    item_vector = jax.random.randint(ki, (batch,), 0, n_items, dtype=jnp.int32)

    out = gmf_apply(params, user_vector, item_vector)
    out = jax.block_until_ready(out)

    # Pure-JAX reference for sanity.
    u = params["user_table"][user_vector]
    v = params["item_table"][item_vector]
    ref = jax.nn.sigmoid((u * v) @ params["w"].T + params["b"][0, 0])
    assert out.shape == (batch, 1)
    assert jnp.allclose(out, ref, atol=1e-5, rtol=1e-5)

    print("KERNEL_OK")
</pallas_src>

<mosaic_0001>
module attributes {stable_mosaic.version = 11 : i64} {
  func.func @gmf_kernel(%arg0: i32, %arg1: memref<128x32xf32, #tpu.memory_space<vmem>>, %arg2: memref<128x32xf32, #tpu.memory_space<vmem>>, %arg3: memref<1x32xf32, #tpu.memory_space<vmem>>, %arg4: memref<1x1xf32, #tpu.memory_space<smem>>, %arg5: memref<1x128xf32, #tpu.memory_space<vmem>>) attributes {dimension_semantics = [#tpu.dimension_semantics<parallel>], iteration_bounds = array<i64: 1>, scalar_prefetch = 0 : i64, scratch_operands = 0 : i64, tpu.core_type = #tpu.core_type<tc>, window_params = [{transform_indices = @transform_0, window_bounds = array<i64: 128, 32>}, {transform_indices = @transform_1, window_bounds = array<i64: 128, 32>}, {pipeline_mode = #tpu.pipeline_mode<synchronous>, transform_indices = @transform_2, window_bounds = array<i64: 1, 32>}, {transform_indices = @transform_3, window_bounds = array<i64: 1, 1>}, {transform_indices = @transform_4, window_bounds = array<i64: 1, 128>}]} {
    %c0 = arith.constant 0 : index
    %c0_0 = arith.constant 0 : index
    %0 = vector.load %arg1[%c0, %c0_0] : memref<128x32xf32, #tpu.memory_space<vmem>>, vector<128x32xf32>
    %c0_1 = arith.constant 0 : index
    %c0_2 = arith.constant 0 : index
    %1 = vector.load %arg2[%c0_1, %c0_2] : memref<128x32xf32, #tpu.memory_space<vmem>>, vector<128x32xf32>
    %2 = arith.mulf %0, %1 : vector<128x32xf32>
    %c0_3 = arith.constant 0 : index
    %c0_4 = arith.constant 0 : index
    %3 = vector.load %arg3[%c0_3, %c0_4] : memref<1x32xf32, #tpu.memory_space<vmem>>, vector<1x32xf32>
    %4 = vector.broadcast %3 : vector<1x32xf32> to vector<128x32xf32>
    %5 = arith.mulf %2, %4 : vector<128x32xf32>
    %cst = arith.constant dense<0.000000e+00> : vector<128xf32>
    %6 = vector.multi_reduction <add>, %5, %cst [1] : vector<128x32xf32> to vector<128xf32>
    %c0_5 = arith.constant 0 : index
    %c0_6 = arith.constant 0 : index
    %7 = memref.load %arg4[%c0_5, %c0_6] : memref<1x1xf32, #tpu.memory_space<smem>>
    %8 = vector.broadcast %7 : f32 to vector<128xf32>
    %9 = arith.addf %6, %8 : vector<128xf32>
    %10 = arith.negf %9 : vector<128xf32>
    %11 = math.exp %10 : vector<128xf32>
    %cst_7 = arith.constant 1.000000e+00 : f32
    %12 = vector.broadcast %cst_7 : f32 to vector<128xf32>
    %13 = arith.addf %12, %11 : vector<128xf32>
    %14 = arith.divf %12, %13 : vector<128xf32>
    %c0_8 = arith.constant 0 : index
    %c0_9 = arith.constant 0 : index
    %15 = vector.load %arg5[%c0_8, %c0_9] : memref<1x128xf32, #tpu.memory_space<vmem>>, vector<1x128xf32>
    %16 = vector.shape_cast %15 : vector<1x128xf32> to vector<128xf32>
    %17 = vector.shape_cast %14 : vector<128xf32> to vector<1x128xf32>
    tpu.vector_store %arg5[%c0_8, %c0_9], %17 {strides = array<i32>} : memref<1x128xf32, #tpu.memory_space<vmem>>, vector<1x128xf32>,
    return
  }
  func.func @transform_0(%arg0: i32) -> (i32, i32) {
    %c0_i32 = arith.constant 0 : i32
    %c0_i32_0 = arith.constant 0 : i32
    return %arg0, %c0_i32 : i32, i32
  }
  func.func @transform_1(%arg0: i32) -> (i32, i32) {
    %c0_i32 = arith.constant 0 : i32
    %c0_i32_0 = arith.constant 0 : i32
    return %arg0, %c0_i32 : i32, i32
  }
  func.func @transform_2(%arg0: i32) -> (i32, i32) {
    %c0_i32 = arith.constant 0 : i32
    %c0_i32_0 = arith.constant 0 : i32
    %c0_i32_1 = arith.constant 0 : i32
    return %c0_i32, %c0_i32_0 : i32, i32
  }
  func.func @transform_3(%arg0: i32) -> (i32, i32) {
    %c0_i32 = arith.constant 0 : i32
    %c0_i32_0 = arith.constant 0 : i32
    %c0_i32_1 = arith.constant 0 : i32
    return %c0_i32, %c0_i32_0 : i32, i32
  }
  func.func @transform_4(%arg0: i32) -> (i32, i32) {
    %c0_i32 = arith.constant 0 : i32
    %c0_i32_0 = arith.constant 0 : i32
    return %c0_i32, %arg0 : i32, i32
  }
}

</mosaic_0001>

<llo_original>
// kernel: tpu_custom_call.1
$region0: #{tpu_custom_call.1}
  #allocation0 [shape = 'u32[]', space=smem, size = 0x4, offset = 0x4, fixed_abs, tag = 'smem constant byte address 0x4 - core index']
  #allocation1 [shape = 'u32[144,128]{1,0:T(1,128)}', space=vmem, size = 0x12000, scoped, tag = 'internal scratch']
  #allocation2 [shape = 'f32[1,1]{1,0:T(1,128)S(6)}', space=smem, size = 0x200, scoped, tag = 'scoped memory for tpu_custom_call.1']
  %s0 = inlined_call_operand.vmem [shape: f32[128,32], index: 0, kind: input, shape index: {}]
  %s1 = inlined_call_operand.vmem [shape: f32[128,32], index: 1, kind: input, shape index: {}]
  %s2 = inlined_call_operand.vmem [shape: f32[1,32], index: 2, kind: input, shape index: {}]
  %s3 = inlined_call_operand.<no memory space> [shape: f32[1,1], index: 3, kind: input, shape index: {}]
  %s4 = inlined_call_operand.hbm [shape: f32[1,128], index: 4, kind: output, shape index: {}]
  %s5 = sld [smem:[#allocation0]]
  $region26: #{tpu_custom_call.1} parent=0
    _
  %s7 = ssub.s32 1, %s5
  %s8 = scalar_select 0, %s7, %s5
  %9 = sst [smem:[#allocation2]] %s3
  $region1: #{tpu_custom_call.1} parent=0
    #allocation3 [shape = 'u8[512]{0}', space=vmem, size = 0x400, scoped, tag = 'output window, operand 0, single buffered']
    #allocation4 [shape = 's32[1]{0}', space=sflag, size = 0x4, scoped, tag = 'scoped memory for tpu_custom_call.1']
    %10 = vsyncpa [#allocation4], 0
    // Predicated region
    $region2: #{tpu_custom_call.1} parent=1 // pred_check
      _
    $region3: #{tpu_custom_call.1} parent=1 // pred_check_branch
      %12 = sbr.rel (0) target = $region5
    $region4: #{tpu_custom_call.1} parent=1 // pred_region
      _
    $region5: #{tpu_custom_call.1} parent=1 // pred_fallthru
      _
    // Predicated region
    $region6: #{tpu_custom_call.1} parent=1 // pred_check
      _
    $region7: #{tpu_custom_call.1} parent=1 // pred_check_branch
      %14 = sbr.rel (0) target = $region9
    $region8: #{tpu_custom_call.1} parent=1 // pred_region
      _
    $region9: #{tpu_custom_call.1} parent=1 // pred_fallthru
      _
    // Predicated region
    $region10: #{tpu_custom_call.1} parent=1 // pred_check
      _
    $region11: #{tpu_custom_call.1} parent=1 // pred_check_branch
      %16 = sbr.rel (0) target = $region13
    $region12: #{tpu_custom_call.1} parent=1 // pred_region
      _
    $region13: #{tpu_custom_call.1} parent=1 // pred_fallthru
      _
    // Predicated region
    $region14: #{tpu_custom_call.1} parent=1 // pred_check
      _
    $region15: #{tpu_custom_call.1} parent=1 // pred_check_branch
      %18 = sbr.rel (0) target = $region17
    $region16: #{tpu_custom_call.1} parent=1 // pred_region
      _
    $region17: #{tpu_custom_call.1} parent=1 // pred_fallthru
      _
    %v19 = vld [vmem:[%s0] sm:$0xff]
    %v20 = vld [vmem:[%s0 + $0x8] sm:$0xff]
    %v21 = vld [vmem:[%s0 + $0x10] sm:$0xff]
    %v22 = vld [vmem:[%s0 + $0x18] sm:$0xff]
    %v23 = vld [vmem:[%s0 + $0x20] sm:$0xff]
    %v24 = vld [vmem:[%s0 + $0x28] sm:$0xff]
    %v25 = vld [vmem:[%s0 + $0x30] sm:$0xff]
    %v26 = vld [vmem:[%s0 + $0x38] sm:$0xff]
    %v27 = vld [vmem:[%s0 + $0x40] sm:$0xff]
    %v28 = vld [vmem:[%s0 + $0x48] sm:$0xff]
    %v29 = vld [vmem:[%s0 + $0x50] sm:$0xff]
    %v30 = vld [vmem:[%s0 + $0x58] sm:$0xff]
    %v31 = vld [vmem:[%s0 + $0x60] sm:$0xff]
    %v32 = vld [vmem:[%s0 + $0x68] sm:$0xff]
    %v33 = vld [vmem:[%s0 + $0x70] sm:$0xff]
    %v34 = vld [vmem:[%s0 + $0x78] sm:$0xff]
    %v35 = vld [vmem:[%s1] sm:$0xff]
    %v36 = vld [vmem:[%s1 + $0x8] sm:$0xff]
    %v37 = vld [vmem:[%s1 + $0x10] sm:$0xff]
    %v38 = vld [vmem:[%s1 + $0x18] sm:$0xff]
    %v39 = vld [vmem:[%s1 + $0x20] sm:$0xff]
    %v40 = vld [vmem:[%s1 + $0x28] sm:$0xff]
    %v41 = vld [vmem:[%s1 + $0x30] sm:$0xff]
    %v42 = vld [vmem:[%s1 + $0x38] sm:$0xff]
    %v43 = vld [vmem:[%s1 + $0x40] sm:$0xff]
    %v44 = vld [vmem:[%s1 + $0x48] sm:$0xff]
    %v45 = vld [vmem:[%s1 + $0x50] sm:$0xff]
    %v46 = vld [vmem:[%s1 + $0x58] sm:$0xff]
    %v47 = vld [vmem:[%s1 + $0x60] sm:$0xff]
    %v48 = vld [vmem:[%s1 + $0x68] sm:$0xff]
    %v49 = vld [vmem:[%s1 + $0x70] sm:$0xff]
    %v50 = vld [vmem:[%s1 + $0x78] sm:$0xff]
    %v51 = vmul.f32 %v19, %v35
    %v52 = vmul.f32 %v20, %v36
    %v53 = vmul.f32 %v21, %v37
    %v54 = vmul.f32 %v22, %v38
    %v55 = vmul.f32 %v23, %v39
    %v56 = vmul.f32 %v24, %v40
    %v57 = vmul.f32 %v25, %v41
    %v58 = vmul.f32 %v26, %v42
    %v59 = vmul.f32 %v27, %v43
    %v60 = vmul.f32 %v28, %v44
    %v61 = vmul.f32 %v29, %v45
    %v62 = vmul.f32 %v30, %v46
    %v63 = vmul.f32 %v31, %v47
    %v64 = vmul.f32 %v32, %v48
    %v65 = vmul.f32 %v33, %v49
    %v66 = vmul.f32 %v34, %v50
    %v67 = vld [vmem:[%s2] sm:$0x1]
    %v69 = vlaneseq
    %v70 = vshrl.u32 %v69, 7
    %v71 = vsub.s32 0, %v70
    %v72 = vrot.slane %v67, %v71
    %v74 = vmul.f32 %v51, %v72
    %v75 = vmul.f32 %v52, %v72
    %v76 = vmul.f32 %v53, %v72
    %v77 = vmul.f32 %v54, %v72
    %v78 = vmul.f32 %v55, %v72
    %v79 = vmul.f32 %v56, %v72
    %v80 = vmul.f32 %v57, %v72
    %v81 = vmul.f32 %v58, %v72
    %v82 = vmul.f32 %v59, %v72
    %v83 = vmul.f32 %v60, %v72
    %v84 = vmul.f32 %v61, %v72
    %v85 = vmul.f32 %v62, %v72
    %v86 = vmul.f32 %v63, %v72
    %v87 = vmul.f32 %v64, %v72
    %v88 = vmul.f32 %v65, %v72
    %v89 = vmul.f32 %v66, %v72
    %vm90 = vcmask 261120
    %v91 = vsel %vm90, %v74, 0.0
    %92 = vadd.xlane.f32.xlu0 %v91
    %v93 = vpop.xlane.xlu0 %92
    %v94 = vsel %vm90, %v75, 0.0
    %95 = vadd.xlane.f32.xlu0 %v94
    %v96 = vpop.xlane.xlu0 %95
    %v97 = vsel %vm90, %v76, 0.0
    %98 = vadd.xlane.f32.xlu0 %v97
    %v99 = vpop.xlane.xlu0 %98
    %v100 = vsel %vm90, %v77, 0.0
    %101 = vadd.xlane.f32.xlu0 %v100
    %v102 = vpop.xlane.xlu0 %101
    %v103 = vsel %vm90, %v78, 0.0
    %104 = vadd.xlane.f32.xlu0 %v103
    %v105 = vpop.xlane.xlu0 %104
    %v106 = vsel %vm90, %v79, 0.0
    %107 = vadd.xlane.f32.xlu0 %v106
    %v108 = vpop.xlane.xlu0 %107
    %v109 = vsel %vm90, %v80, 0.0
    %110 = vadd.xlane.f32.xlu0 %v109
    %v111 = vpop.xlane.xlu0 %110
    %v112 = vsel %vm90, %v81, 0.0
    %113 = vadd.xlane.f32.xlu0 %v112
    %v114 = vpop.xlane.xlu0 %113
    %v115 = vsel %vm90, %v82, 0.0
    %116 = vadd.xlane.f32.xlu0 %v115
    %v117 = vpop.xlane.xlu0 %116
    %v118 = vsel %vm90, %v83, 0.0
    %119 = vadd.xlane.f32.xlu0 %v118
    %v120 = vpop.xlane.xlu0 %119
    %v121 = vsel %vm90, %v84, 0.0
    %122 = vadd.xlane.f32.xlu0 %v121
    %v123 = vpop.xlane.xlu0 %122
    %v124 = vsel %vm90, %v85, 0.0
    %125 = vadd.xlane.f32.xlu0 %v124
    %v126 = vpop.xlane.xlu0 %125
    %v127 = vsel %vm90, %v86, 0.0
    %128 = vadd.xlane.f32.xlu0 %v127
    %v129 = vpop.xlane.xlu0 %128
    %v130 = vsel %vm90, %v87, 0.0
    %131 = vadd.xlane.f32.xlu0 %v130
    %v132 = vpop.xlane.xlu0 %131
    %v133 = vsel %vm90, %v88, 0.0
    %134 = vadd.xlane.f32.xlu0 %v133
    %v135 = vpop.xlane.xlu0 %134
    %v136 = vsel %vm90, %v89, 0.0
    %137 = vadd.xlane.f32.xlu0 %v136
    %v138 = vpop.xlane.xlu0 %137
    %s139 = sld [smem:[#allocation2]]
    %v140 = vstv %s139
    %v141 = vadd.f32 %v93, %v140
    %v142 = vadd.f32 %v96, %v140
    %v143 = vadd.f32 %v99, %v140
    %v144 = vadd.f32 %v102, %v140
    %v145 = vadd.f32 %v105, %v140
    %v146 = vadd.f32 %v108, %v140
    %v147 = vadd.f32 %v111, %v140
    %v148 = vadd.f32 %v114, %v140
    %v149 = vadd.f32 %v117, %v140
    %v150 = vadd.f32 %v120, %v140
    %v151 = vadd.f32 %v123, %v140
    %v152 = vadd.f32 %v126, %v140
    %v153 = vadd.f32 %v129, %v140
    %v154 = vadd.f32 %v132, %v140
    %v155 = vadd.f32 %v135, %v140
    %v156 = vadd.f32 %v138, %v140
    %v157 = vxor.u32 %v141, 2147483648
    %v158 = vxor.u32 %v142, 2147483648
    %v159 = vxor.u32 %v143, 2147483648
    %v160 = vxor.u32 %v144, 2147483648
    %v161 = vxor.u32 %v145, 2147483648
    %v162 = vxor.u32 %v146, 2147483648
    %v163 = vxor.u32 %v147, 2147483648
    %v164 = vxor.u32 %v148, 2147483648
    %v165 = vxor.u32 %v149, 2147483648
    %v166 = vxor.u32 %v150, 2147483648
    %v167 = vxor.u32 %v151, 2147483648
    %v168 = vxor.u32 %v152, 2147483648
    %v169 = vxor.u32 %v153, 2147483648
    %v170 = vxor.u32 %v154, 2147483648
    %v171 = vxor.u32 %v155, 2147483648
    %v172 = vxor.u32 %v156, 2147483648
    %v173 = vmul.f32 %v157, 1.442695
    %v174 = vpow.pop %v173
    %v175 = vmul.f32 %v158, 1.442695
    %v176 = vpow.pop %v175
    %v177 = vmul.f32 %v159, 1.442695
    %v178 = vpow.pop %v177
    %v179 = vmul.f32 %v160, 1.442695
    %v180 = vpow.pop %v179
    %v181 = vmul.f32 %v161, 1.442695
    %v182 = vpow.pop %v181
    %v183 = vmul.f32 %v162, 1.442695
    %v184 = vpow.pop %v183
    %v185 = vmul.f32 %v163, 1.442695
    %v186 = vpow.pop %v185
    %v187 = vmul.f32 %v164, 1.442695
    %v188 = vpow.pop %v187
    %v189 = vmul.f32 %v165, 1.442695
    %v190 = vpow.pop %v189
    %v191 = vmul.f32 %v166, 1.442695
    %v192 = vpow.pop %v191
    %v193 = vmul.f32 %v167, 1.442695
    %v194 = vpow.pop %v193
    %v195 = vmul.f32 %v168, 1.442695
    %v196 = vpow.pop %v195
    %v197 = vmul.f32 %v169, 1.442695
    %v198 = vpow.pop %v197
    %v199 = vmul.f32 %v170, 1.442695
    %v200 = vpow.pop %v199
    %v201 = vmul.f32 %v171, 1.442695
    %v202 = vpow.pop %v201
    %v203 = vmul.f32 %v172, 1.442695
    %v204 = vpow.pop %v203
    %v205 = vadd.f32 %v174, 1.0
    %v206 = vadd.f32 %v176, 1.0
    %v207 = vadd.f32 %v178, 1.0
    %v208 = vadd.f32 %v180, 1.0
    %v209 = vadd.f32 %v182, 1.0
    %v210 = vadd.f32 %v184, 1.0
    %v211 = vadd.f32 %v186, 1.0
    %v212 = vadd.f32 %v188, 1.0
    %v213 = vadd.f32 %v190, 1.0
    %v214 = vadd.f32 %v192, 1.0
    %v215 = vadd.f32 %v194, 1.0
    %v216 = vadd.f32 %v196, 1.0
    %v217 = vadd.f32 %v198, 1.0
    %v218 = vadd.f32 %v200, 1.0
    %v219 = vadd.f32 %v202, 1.0
    %v220 = vadd.f32 %v204, 1.0
    %v221 = vrcp.pop %v205
    %v222 = vmul.f32 1.0, %v221
    %v223 = vrcp.pop %v206
    %v224 = vmul.f32 1.0, %v223
    %v225 = vrcp.pop %v207
    %v226 = vmul.f32 1.0, %v225
    %v227 = vrcp.pop %v208
    %v228 = vmul.f32 1.0, %v227
    %v229 = vrcp.pop %v209
    %v230 = vmul.f32 1.0, %v229
    %v231 = vrcp.pop %v210
    %v232 = vmul.f32 1.0, %v231
    %v233 = vrcp.pop %v211
    %v234 = vmul.f32 1.0, %v233
    %v235 = vrcp.pop %v212
    %v236 = vmul.f32 1.0, %v235
    %v237 = vrcp.pop %v213
    %v238 = vmul.f32 1.0, %v237
    %v239 = vrcp.pop %v214
    %v240 = vmul.f32 1.0, %v239
    %v241 = vrcp.pop %v215
    %v242 = vmul.f32 1.0, %v241
    %v243 = vrcp.pop %v216
    %v244 = vmul.f32 1.0, %v243
    %v245 = vrcp.pop %v217
    %v246 = vmul.f32 1.0, %v245
    %v247 = vrcp.pop %v218
    %v248 = vmul.f32 1.0, %v247
    %v249 = vrcp.pop %v219
    %v250 = vmul.f32 1.0, %v249
    %v251 = vrcp.pop %v220
    %v252 = vmul.f32 1.0, %v251
    %v269 = vlaneseq
    %v270 = vand.u32 %v269, 127
    %v271 = vlaneseq
    %v272 = vshrl.u32 %v271, 7
    %v273 = vsub.s32 %v270, %v272
    %v274 = vrot.slane %v222, %v273
    %v275 = vadd.s32 %v270, 4294967288
    %v276 = vlaneseq
    %v277 = vshrl.u32 %v276, 7
    %v278 = vsub.s32 %v275, %v277
    %v279 = vrot.slane %v224, %v278
    %vm280 = vcmask 130112
    %v281 = vsel %vm280, %v279, %v274
    %v282 = vadd.s32 %v270, 4294967280
    %v283 = vlaneseq
    %v284 = vshrl.u32 %v283, 7
    %v285 = vsub.s32 %v282, %v284
    %v286 = vrot.slane %v226, %v285
    %vm287 = vcmask 195712
    %v288 = vsel %vm287, %v286, %v281
    %v289 = vadd.s32 %v270, 4294967272
    %v290 = vlaneseq
    %v291 = vshrl.u32 %v290, 7
    %v292 = vsub.s32 %v289, %v291
    %v293 = vrot.slane %v228, %v292
    %vm294 = vcmask 261312
    %v295 = vsel %vm294, %v293, %v288
    %v296 = vadd.s32 %v270, 4294967264
    %v297 = vlaneseq
    %v298 = vshrl.u32 %v297, 7
    %v299 = vsub.s32 %v296, %v298
    %v300 = vrot.slane %v230, %v299
    %vm301 = vcmask 326912
    %v302 = vsel %vm301, %v300, %v295
    %v303 = vadd.s32 %v270, 4294967256
    %v304 = vlaneseq
    %v305 = vshrl.u32 %v304, 7
    %v306 = vsub.s32 %v303, %v305
    %v307 = vrot.slane %v232, %v306
    %vm308 = vcmask 392512
    %v309 = vsel %vm308, %v307, %v302
    %v310 = vadd.s32 %v270, 4294967248
    %v311 = vlaneseq
    %v312 = vshrl.u32 %v311, 7
    %v313 = vsub.s32 %v310, %v312
    %v314 = vrot.slane %v234, %v313
    %vm315 = vcmask 458112
    %v316 = vsel %vm315, %v314, %v309
    %v317 = vadd.s32 %v270, 4294967240
    %v318 = vlaneseq
    %v319 = vshrl.u32 %v318, 7
    %v320 = vsub.s32 %v317, %v319
    %v321 = vrot.slane %v236, %v320
    %vm322 = vcmask 523712
    %v323 = vsel %vm322, %v321, %v316
    %v324 = vadd.s32 %v270, 4294967232
    %v325 = vlaneseq
    %v326 = vshrl.u32 %v325, 7
    %v327 = vsub.s32 %v324, %v326
    %v328 = vrot.slane %v238, %v327
    %vm329 = vcmask 589312
    %v330 = vsel %vm329, %v328, %v323
    %v331 = vadd.s32 %v270, 4294967224
    %v332 = vlaneseq
    %v333 = vshrl.u32 %v332, 7
    %v334 = vsub.s32 %v331, %v333
    %v335 = vrot.slane %v240, %v334
    %vm336 = vcmask 654912
    %v337 = vsel %vm336, %v335, %v330
    %v338 = vadd.s32 %v270, 4294967216
    %v339 = vlaneseq
    %v340 = vshrl.u32 %v339, 7
    %v341 = vsub.s32 %v338, %v340
    %v342 = vrot.slane %v242, %v341
    %vm343 = vcmask 720512
    %v344 = vsel %vm343, %v342, %v337
    %v345 = vadd.s32 %v270, 4294967208
    %v346 = vlaneseq
    %v347 = vshrl.u32 %v346, 7
    %v348 = vsub.s32 %v345, %v347
    %v349 = vrot.slane %v244, %v348
    %vm350 = vcmask 786112
    %v351 = vsel %vm350, %v349, %v344
    %v352 = vadd.s32 %v270, 4294967200
    %v353 = vlaneseq
    %v354 = vshrl.u32 %v353, 7
    %v355 = vsub.s32 %v352, %v354
    %v356 = vrot.slane %v246, %v355
    %vm357 = vcmask 851712
    %v358 = vsel %vm357, %v356, %v351
    %v359 = vadd.s32 %v270, 4294967192
    %v360 = vlaneseq
    %v361 = vshrl.u32 %v360, 7
    %v362 = vsub.s32 %v359, %v361
    %v363 = vrot.slane %v248, %v362
    %vm364 = vcmask 917312
    %v365 = vsel %vm364, %v363, %v358
    %v366 = vadd.s32 %v270, 4294967184
    %v367 = vlaneseq
    %v368 = vshrl.u32 %v367, 7
    %v369 = vsub.s32 %v366, %v368
    %v370 = vrot.slane %v250, %v369
    %vm371 = vcmask 982912
    %v372 = vsel %vm371, %v370, %v365
    %v373 = vadd.s32 %v270, 4294967176
    %v374 = vlaneseq
    %v375 = vshrl.u32 %v374, 7
    %v376 = vsub.s32 %v373, %v375
    %v377 = vrot.slane %v252, %v376
    %vm378 = vcmask 1048512
    %v379 = vsel %vm378, %v377, %v372
    %381 = vst [vmem:[#allocation3] sm:$0x1] %v379
    // Predicated region
    $region18: #{tpu_custom_call.1} parent=1 // pred_check
      _
    $region19: #{tpu_custom_call.1} parent=1 // pred_check_branch
      %383 = sbr.rel (0) target = $region21
    $region20: #{tpu_custom_call.1} parent=1 // pred_region
      %s385 = ssub.s32 16, 16
      %386 = vsyncadd [#allocation4], %s385
      %s388 = sshll.u32 [#allocation3], 4
      %s389 = int_to_ptr.vmem [resolvable:$true] %s388
      %391 = dma.vmem_to_hbm [thread:$0]  %s389, 16, %s4, [#allocation4]
    $region21: #{tpu_custom_call.1} parent=1 // pred_fallthru
      _
    // Predicated region
    $region22: #{tpu_custom_call.1} parent=1 // pred_check
      _
    $region23: #{tpu_custom_call.1} parent=1 // pred_check_branch
      %393 = sbr.rel (0) target = $region25
    $region24: #{tpu_custom_call.1} parent=1 // pred_region
      %394 = dma.done [#allocation4], 16
    $region25: #{tpu_custom_call.1} parent=1 // pred_fallthru
      _
    %395 = vsyncpa [#allocation4], 1

</llo_original>
